<compile_context>
chip_gen: v7x
topology: tpu7x:2x2x1
jax: 0.10.0
libtpu: 0.0.40
codegen_flags: <defaults>
</compile_context>

<pallas_src>
import jax
import jax.numpy as jnp
from jax.experimental import pallas as pl
from jax.experimental.pallas import tpu as pltpu


def _round_up(n, m):
    return ((n + m - 1) // m) * m


def dqn_kernel(x_ref, w1_ref, b1_ref, w2_ref, b2_ref, out_ref):
    # x_ref:  (block_b, obs)        f32
    # w1_ref: (obs, hidden_pad)     bf16   (zero-padded columns)
    # b1_ref: (1, hidden_pad)       f32
    # w2_ref: (hidden_pad, act_pad) bf16   (zero-padded rows/cols)
    # b2_ref: (1, act_pad)          f32
    # out_ref:(block_b, act_pad)    f32
    x = x_ref[...]

    # MXU matmul in bf16 with f32 accumulation; bias + ReLU stay f32 (VPU).
    h = jnp.dot(x.astype(jnp.bfloat16), w1_ref[...],
                preferred_element_type=jnp.float32) + b1_ref[...]
    h = jnp.maximum(h, 0.0)  # ReLU

    q = jnp.dot(h.astype(jnp.bfloat16), w2_ref[...],
                preferred_element_type=jnp.float32) + b2_ref[...]
    out_ref[...] = q


def prepare_dqn_params(w1, b1, w2, b2):
    """Pad + cast parameters ONCE (outside the hot loop).

    w1: (obs, hidden) f32, b1: (hidden,) f32,
    w2: (hidden, action) f32, b2: (action,) f32.
    Returns TPU-friendly params:
      w1p (obs, Hp) bf16, b1p (1, Hp) f32, w2p (Hp, Ap) bf16, b2p (1, Ap) f32
    with Hp/Ap = hidden/action rounded up to multiples of 128 (zero padding,
    so the math is unchanged).
    """
    obs, hidden = w1.shape
    action = w2.shape[1]
    hp = _round_up(hidden, 128)
    ap = _round_up(action, 128)

    w1p = jnp.zeros((obs, hp), jnp.float32).at[:, :hidden].set(w1)
    b1p = jnp.zeros((1, hp), jnp.float32).at[:, :hidden].set(b1.reshape(1, -1))
    w2p = jnp.zeros((hp, ap), jnp.float32).at[:hidden, :action].set(w2)
    b2p = jnp.zeros((1, ap), jnp.float32).at[:, :action].set(b2.reshape(1, -1))

    return w1p.astype(jnp.bfloat16), b1p, w2p.astype(jnp.bfloat16), b2p


def dqn_forward(x, w1p, b1p, w2p, b2p, action_size, *, block_b=128):
    """x: (B, obs) f32, prepared params from prepare_dqn_params -> (B, action) f32.

    block_b: batch-tile size (multiple of 128; raise to 256/512 for very large B
    to amortize per-grid-step overhead).
    """
    B, obs = x.shape
    hp = w1p.shape[1]
    ap = w2p.shape[1]

    # Pad the batch to a multiple of the tile (zero rows, sliced off below).
    Bp = _round_up(max(B, block_b), block_b)
    if Bp != B:
        x = jnp.zeros((Bp, obs), x.dtype).at[:B].set(x)

    grid = (Bp // block_b,)

    out = pl.pallas_call(
        dqn_kernel,
        out_shape=jax.ShapeDtypeStruct((Bp, ap), jnp.float32),
        grid=grid,
        in_specs=[
            # Activations: tiled over the batch grid (auto double-buffered).
            pl.BlockSpec((block_b, obs), lambda i: (i, 0)),
            # Weights / biases: constant block index -> resident in VMEM.
            pl.BlockSpec((obs, hp), lambda i: (0, 0)),
            pl.BlockSpec((1, hp), lambda i: (0, 0)),
            pl.BlockSpec((hp, ap), lambda i: (0, 0)),
            pl.BlockSpec((1, ap), lambda i: (0, 0)),
        ],
        # Lane-dense (ap is a multiple of 128) output tile -> unmasked stores.
        out_specs=pl.BlockSpec((block_b, ap), lambda i: (i, 0)),
        compiler_params=pltpu.CompilerParams(
            dimension_semantics=("parallel",)),
    )(x, w1p, b1p, w2p, b2p)

    return out[:B, :action_size]


def init_dqn_params(key, observation_size, hidden_size, action_size):
    """Deterministic init mirroring PyTorch nn.Linear default
    (uniform in +/- 1/sqrt(fan_in)). Weights stored as (in, out)."""
    k1, k2, k3, k4 = jax.random.split(key, 4)
    bound1 = 1.0 / jnp.sqrt(jnp.float32(observation_size))
    bound2 = 1.0 / jnp.sqrt(jnp.float32(hidden_size))
    w1 = jax.random.uniform(k1, (observation_size, hidden_size), jnp.float32,
                            -bound1, bound1)
    b1 = jax.random.uniform(k2, (hidden_size,), jnp.float32, -bound1, bound1)
    w2 = jax.random.uniform(k3, (hidden_size, action_size), jnp.float32,
                            -bound2, bound2)
    b2 = jax.random.uniform(k4, (action_size,), jnp.float32, -bound2, bound2)
    return w1, b1, w2, b2


if __name__ == "__main__":
    # CartPole-like sizes: obs=4, hidden=32, actions=2. Batch=256 so the kernel
    # actually exercises the batch grid (2 tiles of 128) and lane-dense stores.
    observation_size, hidden_size, action_size = 4, 32, 2
    batch = 256

    key = jax.random.PRNGKey(0)
    kx, kp = jax.random.split(key)
    x = jax.random.normal(kx, (batch, observation_size), dtype=jnp.float32)
    w1, b1, w2, b2 = init_dqn_params(kp, observation_size, hidden_size,
                                     action_size)

    # One-time parameter preparation (pad + bf16 cast), then the hot call.
    w1p, b1p, w2p, b2p = prepare_dqn_params(w1, b1, w2, b2)
    q = dqn_forward(x, w1p, b1p, w2p, b2p, action_size)
    q = jax.block_until_ready(q)
    assert q.shape == (batch, action_size)

    # Tight check: pure-JAX reference with the exact same precision path
    # (bf16 MXU inputs, f32 accumulation, f32 bias/ReLU).
    h_ref = jnp.dot(x.astype(jnp.bfloat16), w1p,
                    preferred_element_type=jnp.float32) + b1p
    h_ref = jnp.maximum(h_ref, 0.0)
    q_ref = jnp.dot(h_ref.astype(jnp.bfloat16), w2p,
                    preferred_element_type=jnp.float32) + b2p
    q_ref = q_ref[:, :action_size]
    assert jnp.allclose(q, q_ref, atol=1e-4, rtol=1e-4)

    # Loose check against the full-f32 PyTorch-equivalent math (bf16 rounding
    # at the MXU is the only difference).
    ref_f32 = jnp.maximum(x @ w1 + b1.reshape(1, -1), 0.0) @ w2 + b2.reshape(1, -1)
    assert jnp.allclose(q, ref_f32, atol=5e-2, rtol=5e-2)

    print("KERNEL_OK")
</pallas_src>

<mosaic_0001>
module attributes {stable_mosaic.version = 11 : i64} {
  func.func @dqn_kernel(%arg0: i32, %arg1: memref<128x4xf32, #tpu.memory_space<vmem>>, %arg2: memref<4x128xbf16, #tpu.memory_space<vmem>>, %arg3: memref<1x128xf32, #tpu.memory_space<vmem>>, %arg4: memref<128x128xbf16, #tpu.memory_space<vmem>>, %arg5: memref<1x128xf32, #tpu.memory_space<vmem>>, %arg6: memref<128x128xf32, #tpu.memory_space<vmem>>) attributes {dimension_semantics = [#tpu.dimension_semantics<parallel>], iteration_bounds = array<i64: 2>, scalar_prefetch = 0 : i64, scratch_operands = 0 : i64, tpu.core_type = #tpu.core_type<tc>, window_params = [{transform_indices = @transform_0, window_bounds = array<i64: 128, 4>}, {pipeline_mode = #tpu.pipeline_mode<synchronous>, transform_indices = @transform_1, window_bounds = array<i64: 4, 128>}, {pipeline_mode = #tpu.pipeline_mode<synchronous>, transform_indices = @transform_2, window_bounds = array<i64: 1, 128>}, {pipeline_mode = #tpu.pipeline_mode<synchronous>, transform_indices = @transform_3, window_bounds = array<i64: 128, 128>}, {pipeline_mode = #tpu.pipeline_mode<synchronous>, transform_indices = @transform_4, window_bounds = array<i64: 1, 128>}, {transform_indices = @transform_5, window_bounds = array<i64: 128, 128>}]} {
    %c0 = arith.constant 0 : index
    %c0_0 = arith.constant 0 : index
    %0 = vector.load %arg1[%c0, %c0_0] : memref<128x4xf32, #tpu.memory_space<vmem>>, vector<128x4xf32>
    %1 = arith.truncf %0 : vector<128x4xf32> to vector<128x4xbf16>
    %c0_1 = arith.constant 0 : index
    %c0_2 = arith.constant 0 : index
    %2 = vector.load %arg2[%c0_1, %c0_2] : memref<4x128xbf16, #tpu.memory_space<vmem>>, vector<4x128xbf16>
    %cst = arith.constant dense<0.000000e+00> : vector<128x128xf32>
    %3 = tpu.matmul %1, %2, %cst {dimension_numbers = #tpu.dot_dimension_numbers<[1], [0], [0], [1], [0, 0, 1, 1], [], []>} : vector<128x4xbf16>, vector<4x128xbf16>, vector<128x128xf32> -> vector<128x128xf32>
    %c0_3 = arith.constant 0 : index
    %c0_4 = arith.constant 0 : index
    %4 = vector.load %arg3[%c0_3, %c0_4] : memref<1x128xf32, #tpu.memory_space<vmem>>, vector<1x128xf32>
    %5 = vector.broadcast %4 : vector<1x128xf32> to vector<128x128xf32>
    %6 = arith.addf %3, %5 : vector<128x128xf32>
    %cst_5 = arith.constant 0.000000e+00 : f32
    %7 = vector.broadcast %cst_5 : f32 to vector<128x128xf32>
    %8 = arith.maximumf %6, %7 : vector<128x128xf32>
    %9 = arith.truncf %8 : vector<128x128xf32> to vector<128x128xbf16>
    %c0_6 = arith.constant 0 : index
    %c0_7 = arith.constant 0 : index
    %10 = vector.load %arg4[%c0_6, %c0_7] : memref<128x128xbf16, #tpu.memory_space<vmem>>, vector<128x128xbf16>
    %cst_8 = arith.constant dense<0.000000e+00> : vector<128x128xf32>
    %11 = tpu.matmul %9, %10, %cst_8 {dimension_numbers = #tpu.dot_dimension_numbers<[1], [0], [0], [1], [0, 0, 1, 1], [], []>} : vector<128x128xbf16>, vector<128x128xbf16>, vector<128x128xf32> -> vector<128x128xf32>
    %c0_9 = arith.constant 0 : index
    %c0_10 = arith.constant 0 : index
    %12 = vector.load %arg5[%c0_9, %c0_10] : memref<1x128xf32, #tpu.memory_space<vmem>>, vector<1x128xf32>
    %13 = vector.broadcast %12 : vector<1x128xf32> to vector<128x128xf32>
    %14 = arith.addf %11, %13 : vector<128x128xf32>
    %c0_11 = arith.constant 0 : index
    %c0_12 = arith.constant 0 : index
    %15 = vector.load %arg6[%c0_11, %c0_12] : memref<128x128xf32, #tpu.memory_space<vmem>>, vector<128x128xf32>
    tpu.vector_store %arg6[%c0_11, %c0_12], %14 {strides = array<i32>} : memref<128x128xf32, #tpu.memory_space<vmem>>, vector<128x128xf32>,
    return
  }
  func.func @transform_0(%arg0: i32) -> (i32, i32) {
    %c0_i32 = arith.constant 0 : i32
    %c0_i32_0 = arith.constant 0 : i32
    return %arg0, %c0_i32 : i32, i32
  }
  func.func @transform_1(%arg0: i32) -> (i32, i32) {
    %c0_i32 = arith.constant 0 : i32
    %c0_i32_0 = arith.constant 0 : i32
    %c0_i32_1 = arith.constant 0 : i32
    return %c0_i32, %c0_i32_0 : i32, i32
  }
  func.func @transform_2(%arg0: i32) -> (i32, i32) {
    %c0_i32 = arith.constant 0 : i32
    %c0_i32_0 = arith.constant 0 : i32
    %c0_i32_1 = arith.constant 0 : i32
    return %c0_i32, %c0_i32_0 : i32, i32
  }
  func.func @transform_3(%arg0: i32) -> (i32, i32) {
    %c0_i32 = arith.constant 0 : i32
    %c0_i32_0 = arith.constant 0 : i32
    %c0_i32_1 = arith.constant 0 : i32
    return %c0_i32, %c0_i32_0 : i32, i32
  }
  func.func @transform_4(%arg0: i32) -> (i32, i32) {
    %c0_i32 = arith.constant 0 : i32
    %c0_i32_0 = arith.constant 0 : i32
    %c0_i32_1 = arith.constant 0 : i32
    return %c0_i32, %c0_i32_0 : i32, i32
  }
  func.func @transform_5(%arg0: i32) -> (i32, i32) {
    %c0_i32 = arith.constant 0 : i32
    %c0_i32_0 = arith.constant 0 : i32
    return %arg0, %c0_i32 : i32, i32
  }
}

</mosaic_0001>

<llo_original>
// kernel: tpu_custom_call.1
$region0: #{tpu_custom_call.1}
  #allocation0 [shape = 'u32[]', space=smem, size = 0x4, offset = 0x4, fixed_abs, tag = 'smem constant byte address 0x4 - core index']
  #allocation1 [shape = 'u32[144,128]{1,0:T(1,128)}', space=vmem, size = 0x12000, scoped, tag = 'internal scratch']
  %s0 = inlined_call_operand.vmem [shape: f32[256,4], index: 0, kind: input, shape index: {}]
  %s1 = inlined_call_operand.vmem [shape: bf16[4,128], index: 1, kind: input, shape index: {}]
  %s2 = inlined_call_operand.vmem [shape: f32[1,128], index: 2, kind: input, shape index: {}]
  %s3 = inlined_call_operand.vmem [shape: bf16[128,128], index: 3, kind: input, shape index: {}]
  %s4 = inlined_call_operand.vmem [shape: f32[1,128], index: 4, kind: input, shape index: {}]
  %s5 = inlined_call_operand.hbm [shape: f32[256,128], index: 5, kind: output, shape index: {}]
  %s6 = sld [smem:[#allocation0]]
  $region53: #{tpu_custom_call.1} parent=0
    _
  %s8 = ssub.s32 1, %s6
  %s9 = scalar_select 0, %s8, %s6
  $region1: #{tpu_custom_call.1} parent=0
    #allocation2 [shape = 'u8[131072]{0}', space=vmem, size = 0x20000, scoped, tag = 'output window, operand 0']
    #allocation3 [shape = 's32[2]{0}', space=sflag, size = 0x8, scoped, tag = 'scoped memory for tpu_custom_call.1']
    %10 = vsyncpa [#allocation3], 0
    %s11 = scalar_lea.sflag [#allocation3], 1
    %12 = vsyncpa %s11, 0
    loop: start=0, step=1, limit=4
    $region2: #{tpu_custom_call.1} parent=1 // loop_pre_header
      _
    $region3: #{tpu_custom_call.1} parent=1 // loop_header
      %s14 = sphi 0, %s18
      %p15 = scmp.ge.s32.totalorder %s14, 4
      %s24 = sphi 0, %s26
      %s27 = sphi 0, %s24
      %s28 = sphi 0, %s27
      %s44 = sphi 0, %s28
      %s48 = sphi 0, %s48
      %s50 = sphi 0, %s48
      %s51 = sphi 0, %s50
      %s65 = sphi 0, %s51
      %s69 = sphi 0, %s69
      %s71 = sphi 0, %s69
      %s72 = sphi 0, %s71
      %s86 = sphi 0, %s72
      %s90 = sphi 0, %s90
      %s92 = sphi 0, %s90
      %s93 = sphi 0, %s92
      %s107 = sphi 0, %s93
      %s111 = sphi 0, %s111
      %s113 = sphi 0, %s111
      %s114 = sphi 0, %s113
      %s128 = sphi 0, %s114
      %s134 = sphi 0, %s136
      %s137 = sphi 0, %s134
      %s138 = sphi 0, %s137
      %s154 = sphi 0, %s138
    $region4: #{tpu_custom_call.1} parent=1 // loop_header_branch
      %17 = sbr.rel (%p15) target = $region8
    $region5: #{tpu_custom_call.1} parent=1 // loop_body
      %s19 = ssub.s32 %s14, 1
      %s20 = ssub.s32 %s14, 2
      %s21 = sadd.s32 %s14, 1
      %s22 = ssub.s32 %s14, %s21
      %p23 = scmp.eq.s32.totalorder %s22, 0
      %s25 = sadd.s32 %s24, 1
      %s26 = scalar_select %p23, %s24, %s25
      %p29 = pneg %p23
      %p30 = scmp.eq.s32.totalorder %s14, 1
      %p31 = por %p29, %p30
      %p32 = scmp.ne.s32.totalorder %s24, %s27
      %p33 = scmp.eq.s32.totalorder %s14, 0
      %p34 = por %p32, %p33
      %p35 = scmp.ne.s32.totalorder %s24, %s27
      %p36 = scmp.eq.s32.totalorder %s19, 1
      %p37 = por %p35, %p36
      %p38 = scmp.ne.s32.totalorder %s27, %s28
      %p39 = scmp.eq.s32.totalorder %s19, 0
      %p40 = por %p38, %p39
      %p41 = scmp.ne.s32.totalorder %s27, %s28
      %p42 = scmp.eq.s32.totalorder %s20, 1
      %p43 = por %p41, %p42
      %p45 = scmp.ne.s32.totalorder %s28, %s44
      %p46 = scmp.eq.s32.totalorder %s20, 0
      %p47 = por %p45, %p46
      %s49 = sadd.s32 %s48, 1
      %p52 = scmp.eq.s32.totalorder %s14, 1
      %p53 = scmp.ne.s32.totalorder %s48, %s50
      %p54 = scmp.eq.s32.totalorder %s14, 0
      %p55 = por %p53, %p54
      %p56 = scmp.ne.s32.totalorder %s48, %s50
      %p57 = scmp.eq.s32.totalorder %s19, 1
      %p58 = por %p56, %p57
      %p59 = scmp.ne.s32.totalorder %s50, %s51
      %p60 = scmp.eq.s32.totalorder %s19, 0
      %p61 = por %p59, %p60
      %p62 = scmp.ne.s32.totalorder %s50, %s51
      %p63 = scmp.eq.s32.totalorder %s20, 1
      %p64 = por %p62, %p63
      %p66 = scmp.ne.s32.totalorder %s51, %s65
      %p67 = scmp.eq.s32.totalorder %s20, 0
      %p68 = por %p66, %p67
      %s70 = sadd.s32 %s69, 1
      %p73 = scmp.eq.s32.totalorder %s14, 1
      %p74 = scmp.ne.s32.totalorder %s69, %s71
      %p75 = scmp.eq.s32.totalorder %s14, 0
      %p76 = por %p74, %p75
      %p77 = scmp.ne.s32.totalorder %s69, %s71
      %p78 = scmp.eq.s32.totalorder %s19, 1
      %p79 = por %p77, %p78
      %p80 = scmp.ne.s32.totalorder %s71, %s72
      %p81 = scmp.eq.s32.totalorder %s19, 0
      %p82 = por %p80, %p81
      %p83 = scmp.ne.s32.totalorder %s71, %s72
      %p84 = scmp.eq.s32.totalorder %s20, 1
      %p85 = por %p83, %p84
      %p87 = scmp.ne.s32.totalorder %s72, %s86
      %p88 = scmp.eq.s32.totalorder %s20, 0
      %p89 = por %p87, %p88
      %s91 = sadd.s32 %s90, 1
      %p94 = scmp.eq.s32.totalorder %s14, 1
      %p95 = scmp.ne.s32.totalorder %s90, %s92
      %p96 = scmp.eq.s32.totalorder %s14, 0
      %p97 = por %p95, %p96
      %p98 = scmp.ne.s32.totalorder %s90, %s92
      %p99 = scmp.eq.s32.totalorder %s19, 1
      %p100 = por %p98, %p99
      %p101 = scmp.ne.s32.totalorder %s92, %s93
      %p102 = scmp.eq.s32.totalorder %s19, 0
      %p103 = por %p101, %p102
      %p104 = scmp.ne.s32.totalorder %s92, %s93
      %p105 = scmp.eq.s32.totalorder %s20, 1
      %p106 = por %p104, %p105
      %p108 = scmp.ne.s32.totalorder %s93, %s107
      %p109 = scmp.eq.s32.totalorder %s20, 0
      %p110 = por %p108, %p109
      %s112 = sadd.s32 %s111, 1
      %p115 = scmp.eq.s32.totalorder %s14, 1
      %p116 = scmp.ne.s32.totalorder %s111, %s113
      %p117 = scmp.eq.s32.totalorder %s14, 0
      %p118 = por %p116, %p117
      %p119 = scmp.ne.s32.totalorder %s111, %s113
      %p120 = scmp.eq.s32.totalorder %s19, 1
      %p121 = por %p119, %p120
      %p122 = scmp.ne.s32.totalorder %s113, %s114
      %p123 = scmp.eq.s32.totalorder %s19, 0
      %p124 = por %p122, %p123
      %p125 = scmp.ne.s32.totalorder %s113, %s114
      %p126 = scmp.eq.s32.totalorder %s20, 1
      %p127 = por %p125, %p126
      %p129 = scmp.ne.s32.totalorder %s114, %s128
      %p130 = scmp.eq.s32.totalorder %s20, 0
      %p131 = por %p129, %p130
      %s132 = ssub.s32 %s14, %s21
      %p133 = scmp.eq.s32.totalorder %s132, 0
      %s135 = sadd.s32 %s134, 1
      %s136 = scalar_select %p133, %s134, %s135
      %p139 = pneg %p133
      %p140 = scmp.eq.s32.totalorder %s14, 1
      %p141 = por %p139, %p140
      %p142 = scmp.ne.s32.totalorder %s134, %s137
      %p143 = scmp.eq.s32.totalorder %s14, 0
      %p144 = por %p142, %p143
      %p145 = scmp.ne.s32.totalorder %s134, %s137
      %p146 = scmp.eq.s32.totalorder %s19, 1
      %p147 = por %p145, %p146
      %p148 = scmp.ne.s32.totalorder %s137, %s138
      %p149 = scmp.eq.s32.totalorder %s19, 0
      %p150 = por %p148, %p149
      %p151 = scmp.ne.s32.totalorder %s137, %s138
      %p152 = scmp.eq.s32.totalorder %s20, 1
      %p153 = por %p151, %p152
      %p155 = scmp.ne.s32.totalorder %s138, %s154
      %p156 = scmp.eq.s32.totalorder %s20, 0
      %p157 = por %p155, %p156
      %p158 = scmp.le.s32.totalorder 1, %s14
      %p159 = scmp.lt.s32.totalorder %s14, 3
      %p160 = pnand %p158, %p159
      %p161 = pneg %p160
      // Predicated region
      $region9: #{tpu_custom_call.1} parent=5 // pred_check
        _
      $region10: #{tpu_custom_call.1} parent=5 // pred_check_branch
        %163 = sbr.rel (%p160) target = $region12
      $region11: #{tpu_custom_call.1} parent=5 // pred_region
        %s164 = ssub.s32 %s14, 1
        // Predicated region
        $region13: #{tpu_custom_call.1} parent=11 // pred_check
          %p165 = pneg %p61
        $region14: #{tpu_custom_call.1} parent=11 // pred_check_branch
          %167 = sbr.rel (%p165) target = $region16
        $region15: #{tpu_custom_call.1} parent=11 // pred_region
          _
        $region16: #{tpu_custom_call.1} parent=11 // pred_fallthru
          _
        // Predicated region
        $region17: #{tpu_custom_call.1} parent=11 // pred_check
          %p168 = pneg %p82
        $region18: #{tpu_custom_call.1} parent=11 // pred_check_branch
          %170 = sbr.rel (%p168) target = $region20
        $region19: #{tpu_custom_call.1} parent=11 // pred_region
          _
        $region20: #{tpu_custom_call.1} parent=11 // pred_fallthru
          _
        // Predicated region
        $region21: #{tpu_custom_call.1} parent=11 // pred_check
          %p171 = pneg %p103
        $region22: #{tpu_custom_call.1} parent=11 // pred_check_branch
          %173 = sbr.rel (%p171) target = $region24
        $region23: #{tpu_custom_call.1} parent=11 // pred_region
          _
        $region24: #{tpu_custom_call.1} parent=11 // pred_fallthru
          _
        // Predicated region
        $region25: #{tpu_custom_call.1} parent=11 // pred_check
          %p174 = pneg %p124
        $region26: #{tpu_custom_call.1} parent=11 // pred_check_branch
          %176 = sbr.rel (%p174) target = $region28
        $region27: #{tpu_custom_call.1} parent=11 // pred_region
          _
        $region28: #{tpu_custom_call.1} parent=11 // pred_fallthru
          _
      $region12: #{tpu_custom_call.1} parent=5 // pred_fallthru
        _
      %p177 = scmp.lt.s32.totalorder %s14, 2
      // Predicated region
      $region29: #{tpu_custom_call.1} parent=5 // pred_check
        %p178 = pneg %p177
      $region30: #{tpu_custom_call.1} parent=5 // pred_check_branch
        %180 = sbr.rel (%p178) target = $region32
      $region31: #{tpu_custom_call.1} parent=5 // pred_region
        // Predicated region
        $region33: #{tpu_custom_call.1} parent=31 // pred_check
          %p181 = pneg %p34
        $region34: #{tpu_custom_call.1} parent=31 // pred_check_branch
          %183 = sbr.rel (%p181) target = $region36
        $region35: #{tpu_custom_call.1} parent=31 // pred_region
          %s184 = smul.u32 16, %s14
          %p185 = scmp.lt.s32.totalorder %s184, 31
          %s186 = scalar_select %p185, %s184, 31
          %s187 = smul.addr %s186, 8
          %s188 = scalar_lea.vmem %s0, %s187
          %s189 = smul.u32 16, %s14
        $region36: #{tpu_custom_call.1} parent=31 // pred_fallthru
          _
      $region32: #{tpu_custom_call.1} parent=5 // pred_fallthru
        _
      %p190 = scmp.le.s32.totalorder 1, %s14
      %p191 = scmp.lt.s32.totalorder %s14, 3
      %p192 = pnand %p190, %p191
      %p193 = pneg %p192
      // Predicated region
      $region37: #{tpu_custom_call.1} parent=5 // pred_check
        _
      $region38: #{tpu_custom_call.1} parent=5 // pred_check_branch
        %195 = sbr.rel (%p192) target = $region40
      $region39: #{tpu_custom_call.1} parent=5 // pred_region
        %s196 = ssub.s32 %s14, 1
        %s197 = smul.u32 16, %s19
        %p198 = scmp.lt.s32.totalorder %s197, 31
        %s199 = scalar_select %p198, %s197, 31
        %s200 = smul.addr %s199, 8
        %s201 = scalar_lea.vmem %s0, %s200
        %p202 = pneg %p40
        %p203 = pneg %p37
        %p204 = pneg %p61
        %p205 = pneg %p58
        %p206 = pneg %p82
        %p207 = pneg %p79
        %p208 = pneg %p103
        %p209 = pneg %p100
        %p210 = pneg %p124
        %p211 = pneg %p121
        %p212 = pneg %p150
        %p213 = pneg %p147
        %s214 = sand.u32 %s137, 1
        %s215 = scalar_lea.sflag [#allocation3], %s214
        %s216 = sand.u32 %s137, 1
        %s217 = smul.addr %s216, 128
        %s218 = scalar_lea.vmem [#allocation2], %s217
        %s219 = smul.u32 16, %s19
        %p220 = scmp.lt.s32.totalorder %s219, 31
        %s221 = scalar_select %p220, %s219, 31
        %s222 = smul.addr %s221, 8
        %s223 = scalar_lea.vmem %s0, %s222
        %s224 = smul.u32 16, %s19
        %s225 = smul.u32 16, %s19
        %v227 = vld [vmem:[%s223] sm:$0xff]
        %v228 = vld [vmem:[%s223 + $0x8] sm:$0xff]
        %v229 = vld [vmem:[%s223 + $0x10] sm:$0xff]
        %v230 = vld [vmem:[%s223 + $0x18] sm:$0xff]
        %v231 = vld [vmem:[%s223 + $0x20] sm:$0xff]
        %v232 = vld [vmem:[%s223 + $0x28] sm:$0xff]
        %v233 = vld [vmem:[%s223 + $0x30] sm:$0xff]
        %v234 = vld [vmem:[%s223 + $0x38] sm:$0xff]
        %v235 = vld [vmem:[%s223 + $0x40] sm:$0xff]
        %v236 = vld [vmem:[%s223 + $0x48] sm:$0xff]
        %v237 = vld [vmem:[%s223 + $0x50] sm:$0xff]
        %v238 = vld [vmem:[%s223 + $0x58] sm:$0xff]
        %v239 = vld [vmem:[%s223 + $0x60] sm:$0xff]
        %v240 = vld [vmem:[%s223 + $0x68] sm:$0xff]
        %v241 = vld [vmem:[%s223 + $0x70] sm:$0xff]
        %v242 = vld [vmem:[%s223 + $0x78] sm:$0xff]
        %v243 = vpack.c.bf16 %v228, %v227
        %v244 = vpack.c.bf16 %v230, %v229
        %v245 = vpack.c.bf16 %v232, %v231
        %v246 = vpack.c.bf16 %v234, %v233
        %v247 = vpack.c.bf16 %v236, %v235
        %v248 = vpack.c.bf16 %v238, %v237
        %v249 = vpack.c.bf16 %v240, %v239
        %v250 = vpack.c.bf16 %v242, %v241
        %v251 = vld [vmem:[%s1] sm:$0x3]
        %v252 = vld [vmem:[%s2] sm:$0x1]
        %v254 = vlaneseq
        %v255 = vshrl.u32 %v254, 7
        %v256 = vsub.s32 0, %v255
        %v257 = vrot.slane %v252, %v256
        %vm259 = vcmask 31744
        %v261 = vsel %vm259, %v243, 0
        %v264 = vsel %vm259, %v244, 0
        %v267 = vsel %vm259, %v245, 0
        %v270 = vsel %vm259, %v246, 0
        %v273 = vsel %vm259, %v247, 0
        %v276 = vsel %vm259, %v248, 0
        %v279 = vsel %vm259, %v249, 0
        %v282 = vsel %vm259, %v250, 0
        %vm284 = vcmask 1041408
        %v286 = vsel %vm284, %v251, 0
        %288 = vmatprep.subr.bf16.mxu0 0
        %289 = vmatpush1.bf16.msra.mxu0 %v286
        %290 = vmatprep.subr.bf16.mxu0 0
        %291 = vmatpush1.bf16.msra.mxu0 0
        %292 = vmatprep.subr.bf16.mxu0 0
        %293 = vmatpush1.bf16.msra.mxu0 0
        %294 = vmatprep.subr.bf16.mxu0 0
        %295 = vmatpush1.bf16.msra.mxu0 0
        %296 = vmatprep.subr.bf16.mxu0 0
        %297 = vmatpush1.bf16.msra.mxu0 0
        %298 = vmatprep.subr.bf16.mxu0 0
        %299 = vmatpush1.bf16.msra.mxu0 0
        %300 = vmatprep.subr.bf16.mxu0 0
        %301 = vmatpush1.bf16.msra.mxu0 0
        %302 = vmatprep.subr.bf16.mxu0 0
        %303 = vmatpush1.bf16.msra.mxu0 0
        %304 = vmatprep.subr.bf16.mxu0 0
        %305 = vmatpush1.bf16.msra.mxu0 0
        %306 = vmatprep.subr.bf16.mxu0 0
        %307 = vmatpush1.bf16.msra.mxu0 0
        %308 = vmatprep.subr.bf16.mxu0 0
        %309 = vmatpush1.bf16.msra.mxu0 0
        %310 = vmatprep.subr.bf16.mxu0 0
        %311 = vmatpush1.bf16.msra.mxu0 0
        %312 = vmatprep.subr.bf16.mxu0 0
        %313 = vmatpush1.bf16.msra.mxu0 0
        %314 = vmatprep.subr.bf16.mxu0 0
        %315 = vmatpush1.bf16.msra.mxu0 0
        %316 = vmatprep.subr.bf16.mxu0 0
        %317 = vmatpush1.bf16.msra.mxu0 0
        %318 = vmatprep.subr.bf16.mxu0 0
        %319 = vmatpush1.bf16.msra.mxu0 0
        %320 = vmatprep.mubr.bf16.mxu0 0
        %321 = vmatmul.mubr.bf16.gmra.mrb[0].mxu0 %v261
        %v322 = vpop.f32.mrb[0].mxu0
        %v323 = vadd.f32 %v257, %v322
        %v324 = vpop.f32.mrb[0].mxu0
        %v325 = vpop.f32.mrb[0].mxu0
        %v326 = vadd.f32 %v257, %v325
        %v327 = vpop.f32.mrb[0].mxu0
        %328 = vmatprep.mubr.bf16.mxu0 0
        %329 = vmatmul.mubr.bf16.gmra.mrb[0].mxu0 %v264
        %v330 = vpop.f32.mrb[0].mxu0
        %v331 = vadd.f32 %v257, %v330
        %v332 = vpop.f32.mrb[0].mxu0
        %v333 = vpop.f32.mrb[0].mxu0
        %v334 = vadd.f32 %v257, %v333
        %v335 = vpop.f32.mrb[0].mxu0
        %336 = vmatprep.mubr.bf16.mxu0 0
        %337 = vmatmul.mubr.bf16.gmra.mrb[0].mxu0 %v267
        %v338 = vpop.f32.mrb[0].mxu0
        %v339 = vadd.f32 %v257, %v338
        %v340 = vpop.f32.mrb[0].mxu0
        %v341 = vpop.f32.mrb[0].mxu0
        %v342 = vadd.f32 %v257, %v341
        %v343 = vpop.f32.mrb[0].mxu0
        %344 = vmatprep.mubr.bf16.mxu0 0
        %345 = vmatmul.mubr.bf16.gmra.mrb[0].mxu0 %v270
        %v346 = vpop.f32.mrb[0].mxu0
        %v347 = vadd.f32 %v257, %v346
        %v348 = vpop.f32.mrb[0].mxu0
        %v349 = vpop.f32.mrb[0].mxu0
        %v350 = vadd.f32 %v257, %v349
        %v351 = vpop.f32.mrb[0].mxu0
        %352 = vmatprep.mubr.bf16.mxu0 0
        %353 = vmatmul.mubr.bf16.gmra.mrb[0].mxu0 %v273
        %v354 = vpop.f32.mrb[0].mxu0
        %v355 = vadd.f32 %v257, %v354
        %v356 = vpop.f32.mrb[0].mxu0
        %v357 = vpop.f32.mrb[0].mxu0
        %v358 = vadd.f32 %v257, %v357
        %v359 = vpop.f32.mrb[0].mxu0
        %360 = vmatprep.mubr.bf16.mxu0 0
        %361 = vmatmul.mubr.bf16.gmra.mrb[0].mxu0 %v276
        %v362 = vpop.f32.mrb[0].mxu0
        %v363 = vadd.f32 %v257, %v362
        %v364 = vpop.f32.mrb[0].mxu0
        %v365 = vpop.f32.mrb[0].mxu0
        %v366 = vadd.f32 %v257, %v365
        %v367 = vpop.f32.mrb[0].mxu0
        %368 = vmatprep.mubr.bf16.mxu0 0
        %369 = vmatmul.mubr.bf16.gmra.mrb[0].mxu0 %v279
        %v370 = vpop.f32.mrb[0].mxu0
        %v371 = vadd.f32 %v257, %v370
        %v372 = vpop.f32.mrb[0].mxu0
        %v373 = vpop.f32.mrb[0].mxu0
        %v374 = vadd.f32 %v257, %v373
        %v375 = vpop.f32.mrb[0].mxu0
        %376 = vmatprep.mubr.bf16.mxu0 0
        %377 = vmatmul.mubr.bf16.gmra.mrb[0].mxu0 %v282
        %v378 = vpop.f32.mrb[0].mxu0
        %v379 = vadd.f32 %v257, %v378
        %v380 = vpop.f32.mrb[0].mxu0
        %v381 = vpop.f32.mrb[0].mxu0
        %v382 = vadd.f32 %v257, %v381
        %v383 = vpop.f32.mrb[0].mxu0
        %384 = vdwg.mxu0
        %v385 = vmax.f32 %v323, 0.0
        %v386 = vmax.f32 %v326, 0.0
        %v387 = vmax.f32 %v331, 0.0
        %v388 = vmax.f32 %v334, 0.0
        %v389 = vmax.f32 %v339, 0.0
        %v390 = vmax.f32 %v342, 0.0
        %v391 = vmax.f32 %v347, 0.0
        %v392 = vmax.f32 %v350, 0.0
        %v393 = vmax.f32 %v355, 0.0
        %v394 = vmax.f32 %v358, 0.0
        %v395 = vmax.f32 %v363, 0.0
        %v396 = vmax.f32 %v366, 0.0
        %v397 = vmax.f32 %v371, 0.0
        %v398 = vmax.f32 %v374, 0.0
        %v399 = vmax.f32 %v379, 0.0
        %v400 = vmax.f32 %v382, 0.0
        %v401 = vpack.c.bf16 %v386, %v385
        %v402 = vpack.c.bf16 %v388, %v387
        %v403 = vpack.c.bf16 %v390, %v389
        %v404 = vpack.c.bf16 %v392, %v391
        %v405 = vpack.c.bf16 %v394, %v393
        %v406 = vpack.c.bf16 %v396, %v395
        %v407 = vpack.c.bf16 %v398, %v397
        %v408 = vpack.c.bf16 %v400, %v399
        %v409 = vld [vmem:[%s3] sm:$0xf]
        %v410 = vld [vmem:[%s3 + $0x4] sm:$0xf]
        %v411 = vld [vmem:[%s3 + $0x8] sm:$0xf]
        %v412 = vld [vmem:[%s3 + $0xc] sm:$0xf]
        %v413 = vld [vmem:[%s3 + $0x10] sm:$0xf]
        %v414 = vld [vmem:[%s3 + $0x14] sm:$0xf]
        %v415 = vld [vmem:[%s3 + $0x18] sm:$0xf]
        %v416 = vld [vmem:[%s3 + $0x1c] sm:$0xf]
        %v417 = vld [vmem:[%s3 + $0x20] sm:$0xf]
        %v418 = vld [vmem:[%s3 + $0x24] sm:$0xf]
        %v419 = vld [vmem:[%s3 + $0x28] sm:$0xf]
        %v420 = vld [vmem:[%s3 + $0x2c] sm:$0xf]
        %v421 = vld [vmem:[%s3 + $0x30] sm:$0xf]
        %v422 = vld [vmem:[%s3 + $0x34] sm:$0xf]
        %v423 = vld [vmem:[%s3 + $0x38] sm:$0xf]
        %v424 = vld [vmem:[%s3 + $0x3c] sm:$0xf]
        %v425 = vld [vmem:[%s4] sm:$0x1]
        %v427 = vlaneseq
        %v428 = vshrl.u32 %v427, 7
        %v429 = vsub.s32 0, %v428
        %v430 = vrot.slane %v425, %v429
        %v448 = vunpack.c.l.b16 %v409
        %v449 = vunpack.c.l.b16 %v410
        %v450 = vunpack.c.l.b16 %v411
        %v451 = vunpack.c.l.b16 %v412
        %v452 = vunpack.c.l.b16 %v413
        %v453 = vunpack.c.l.b16 %v414
        %v454 = vunpack.c.l.b16 %v415
        %v455 = vunpack.c.l.b16 %v416
        %v456 = vunpack.c.l.b16 %v417
        %v457 = vunpack.c.l.b16 %v418
        %v458 = vunpack.c.l.b16 %v419
        %v459 = vunpack.c.l.b16 %v420
        %v460 = vunpack.c.l.b16 %v421
        %v461 = vunpack.c.l.b16 %v422
        %v462 = vunpack.c.l.b16 %v423
        %v463 = vunpack.c.l.b16 %v424
        %v464 = vpack.c.b16 %v449, %v448
        %v465 = vpack.c.b16 %v451, %v450
        %v466 = vpack.c.b16 %v453, %v452
        %v467 = vpack.c.b16 %v455, %v454
        %v468 = vpack.c.b16 %v457, %v456
        %v469 = vpack.c.b16 %v459, %v458
        %v470 = vpack.c.b16 %v461, %v460
        %v471 = vpack.c.b16 %v463, %v462
        %480 = vmatprep.subr.bf16.mxu0 0
        %481 = vmatpush1.bf16.msra.mxu0 %v464
        %482 = vmatprep.subr.bf16.mxu0 0
        %483 = vmatpush1.bf16.msra.mxu0 %v465
        %484 = vmatprep.subr.bf16.mxu0 0
        %485 = vmatpush1.bf16.msra.mxu0 %v466
        %486 = vmatprep.subr.bf16.mxu0 0
        %487 = vmatpush1.bf16.msra.mxu0 %v467
        %488 = vmatprep.subr.bf16.mxu0 0
        %489 = vmatpush1.bf16.msra.mxu0 %v468
        %490 = vmatprep.subr.bf16.mxu0 0
        %491 = vmatpush1.bf16.msra.mxu0 %v469
        %492 = vmatprep.subr.bf16.mxu0 0
        %493 = vmatpush1.bf16.msra.mxu0 %v470
        %494 = vmatprep.subr.bf16.mxu0 0
        %495 = vmatpush1.bf16.msra.mxu0 %v471
        %496 = vmatprep.subr.bf16.mxu0 0
        %497 = vmatpush1.bf16.msra.mxu0 0
        %498 = vmatprep.subr.bf16.mxu0 0
        %499 = vmatpush1.bf16.msra.mxu0 0
        %500 = vmatprep.subr.bf16.mxu0 0
        %501 = vmatpush1.bf16.msra.mxu0 0
        %502 = vmatprep.subr.bf16.mxu0 0
        %503 = vmatpush1.bf16.msra.mxu0 0
        %504 = vmatprep.subr.bf16.mxu0 0
        %505 = vmatpush1.bf16.msra.mxu0 0
        %506 = vmatprep.subr.bf16.mxu0 0
        %507 = vmatpush1.bf16.msra.mxu0 0
        %508 = vmatprep.subr.bf16.mxu0 0
        %509 = vmatpush1.bf16.msra.mxu0 0
        %510 = vmatprep.subr.bf16.mxu0 0
        %511 = vmatpush1.bf16.msra.mxu0 0
        %512 = vmatprep.mubr.bf16.mxu0 0
        %513 = vmatmul.mubr.bf16.gmra.mrb[0].mxu0 %v401
        %v514 = vpop.f32.mrb[0].mxu0
        %v515 = vadd.f32 %v430, %v514
        %v516 = vpop.f32.mrb[0].mxu0
        %v517 = vpop.f32.mrb[0].mxu0
        %v518 = vadd.f32 %v430, %v517
        %v519 = vpop.f32.mrb[0].mxu0
        %520 = vmatprep.mubr.bf16.mxu0 0
        %521 = vmatmul.mubr.bf16.gmra.mrb[0].mxu0 %v402
        %v522 = vpop.f32.mrb[0].mxu0
        %v523 = vadd.f32 %v430, %v522
        %v524 = vpop.f32.mrb[0].mxu0
        %v525 = vpop.f32.mrb[0].mxu0
        %v526 = vadd.f32 %v430, %v525
        %v527 = vpop.f32.mrb[0].mxu0
        %528 = vmatprep.mubr.bf16.mxu0 0
        %529 = vmatmul.mubr.bf16.gmra.mrb[0].mxu0 %v403
        %v530 = vpop.f32.mrb[0].mxu0
        %v531 = vadd.f32 %v430, %v530
        %v532 = vpop.f32.mrb[0].mxu0
        %v533 = vpop.f32.mrb[0].mxu0
        %v534 = vadd.f32 %v430, %v533
        %v535 = vpop.f32.mrb[0].mxu0
        %536 = vmatprep.mubr.bf16.mxu0 0
        %537 = vmatmul.mubr.bf16.gmra.mrb[0].mxu0 %v404
        %v538 = vpop.f32.mrb[0].mxu0
        %v539 = vadd.f32 %v430, %v538
        %v540 = vpop.f32.mrb[0].mxu0
        %v541 = vpop.f32.mrb[0].mxu0
        %v542 = vadd.f32 %v430, %v541
        %v543 = vpop.f32.mrb[0].mxu0
        %544 = vmatprep.mubr.bf16.mxu0 0
        %545 = vmatmul.mubr.bf16.gmra.mrb[0].mxu0 %v405
        %v546 = vpop.f32.mrb[0].mxu0
        %v547 = vadd.f32 %v430, %v546
        %v548 = vpop.f32.mrb[0].mxu0
        %v549 = vpop.f32.mrb[0].mxu0
        %v550 = vadd.f32 %v430, %v549
        %v551 = vpop.f32.mrb[0].mxu0
        %552 = vmatprep.mubr.bf16.mxu0 0
        %553 = vmatmul.mubr.bf16.gmra.mrb[0].mxu0 %v406
        %v554 = vpop.f32.mrb[0].mxu0
        %v555 = vadd.f32 %v430, %v554
        %v556 = vpop.f32.mrb[0].mxu0
        %v557 = vpop.f32.mrb[0].mxu0
        %v558 = vadd.f32 %v430, %v557
        %v559 = vpop.f32.mrb[0].mxu0
        %560 = vmatprep.mubr.bf16.mxu0 0
        %561 = vmatmul.mubr.bf16.gmra.mrb[0].mxu0 %v407
        %v562 = vpop.f32.mrb[0].mxu0
        %v563 = vadd.f32 %v430, %v562
        %v564 = vpop.f32.mrb[0].mxu0
        %v565 = vpop.f32.mrb[0].mxu0
        %v566 = vadd.f32 %v430, %v565
        %v567 = vpop.f32.mrb[0].mxu0
        %568 = vmatprep.mubr.bf16.mxu0 0
        %569 = vmatmul.mubr.bf16.gmra.mrb[0].mxu0 %v408
        %v570 = vpop.f32.mrb[0].mxu0
        %v571 = vadd.f32 %v430, %v570
        %v572 = vpop.f32.mrb[0].mxu0
        %v573 = vpop.f32.mrb[0].mxu0
        %v574 = vadd.f32 %v430, %v573
        %v575 = vpop.f32.mrb[0].mxu0
        %576 = vdwg.mxu0
        %577 = vst [vmem:[%s218] sm:$0xff] %v515
        %578 = vst [vmem:[%s218 + $0x8] sm:$0xff] %v518
        %579 = vst [vmem:[%s218 + $0x10] sm:$0xff] %v523
        %580 = vst [vmem:[%s218 + $0x18] sm:$0xff] %v526
        %581 = vst [vmem:[%s218 + $0x20] sm:$0xff] %v531
        %582 = vst [vmem:[%s218 + $0x28] sm:$0xff] %v534
        %583 = vst [vmem:[%s218 + $0x30] sm:$0xff] %v539
        %584 = vst [vmem:[%s218 + $0x38] sm:$0xff] %v542
        %585 = vst [vmem:[%s218 + $0x40] sm:$0xff] %v547
        %586 = vst [vmem:[%s218 + $0x48] sm:$0xff] %v550
        %587 = vst [vmem:[%s218 + $0x50] sm:$0xff] %v555
        %588 = vst [vmem:[%s218 + $0x58] sm:$0xff] %v558
        %589 = vst [vmem:[%s218 + $0x60] sm:$0xff] %v563
        %590 = vst [vmem:[%s218 + $0x68] sm:$0xff] %v566
        %591 = vst [vmem:[%s218 + $0x70] sm:$0xff] %v571
        %592 = vst [vmem:[%s218 + $0x78] sm:$0xff] %v574
        %s593 = sand.u32 %s137, 1
        %s594 = scalar_lea.sflag [#allocation3], %s593
        %s595 = sand.u32 %s137, 1
        %s596 = smul.addr %s595, 128
        %s597 = scalar_lea.vmem [#allocation2], %s596
        // Predicated region
        $region41: #{tpu_custom_call.1} parent=39 // pred_check
          %p598 = pneg %p147
        $region42: #{tpu_custom_call.1} parent=39 // pred_check_branch
          %600 = sbr.rel (%p598) target = $region44
        $region43: #{tpu_custom_call.1} parent=39 // pred_region
          %s601 = smul.u32 16, %s19
          %s603 = ssub.s32 2048, 2048
          %604 = vsyncadd %s594, %s603
          %s605 = smul.addr %s601, 128
          %s606 = scalar_lea.hbm %s5, %s605
          %s607 = sshll.u32 %s597, 4
          %s608 = int_to_ptr.vmem [resolvable:$true] %s607
          %613 = dma.vmem_to_hbm [thread:$0]  %s608, 2048, %s606, %s594, 128, 128, 8
        $region44: #{tpu_custom_call.1} parent=39 // pred_fallthru
          _
      $region40: #{tpu_custom_call.1} parent=5 // pred_fallthru
        _
      %p614 = scmp.le.s32.totalorder 2, %s14
      // Predicated region
      $region45: #{tpu_custom_call.1} parent=5 // pred_check
        %p615 = pneg %p614
      $region46: #{tpu_custom_call.1} parent=5 // pred_check_branch
        %617 = sbr.rel (%p615) target = $region48
      $region47: #{tpu_custom_call.1} parent=5 // pred_region
        %s618 = ssub.s32 %s14, 2
        // Predicated region
        $region49: #{tpu_custom_call.1} parent=47 // pred_check
          %p619 = pneg %p153
        $region50: #{tpu_custom_call.1} parent=47 // pred_check_branch
          %621 = sbr.rel (%p619) target = $region52
        $region51: #{tpu_custom_call.1} parent=47 // pred_region
          %s622 = sand.u32 %s138, 1
          %s623 = scalar_lea.sflag [#allocation3], %s622
          %s624 = sand.u32 %s138, 1
          %s625 = smul.addr %s624, 128
          %s626 = scalar_lea.vmem [#allocation2], %s625
          %627 = dma.done %s623, 2048
        $region52: #{tpu_custom_call.1} parent=47 // pred_fallthru
          _
      $region48: #{tpu_custom_call.1} parent=5 // pred_fallthru
        _
    $region6: #{tpu_custom_call.1} parent=1 // loop_footer
      %s18 = sadd.s32 1, %s14
    $region7: #{tpu_custom_call.1} parent=1 // loop_footer_branch
      %13 = sbr.rel target = $region3
    $region8: #{tpu_custom_call.1} parent=1 // loop_exit
      _
    %628 = vsyncpa [#allocation3], 1
    %s629 = scalar_lea.sflag [#allocation3], 1
    %630 = vsyncpa %s629, 1

</llo_original>
